<compile_context>
chip_gen: v7x
topology: tpu7x:2x2x1
jax: 0.10.0
libtpu: 0.0.40
codegen_flags: <defaults>
</compile_context>

<pallas_src>
import jax
import jax.numpy as jnp
from jax.experimental import pallas as pl
from jax.experimental.pallas import tpu as pltpu

LANE = 128          # vreg lane width
SUBLANE = 16        # bf16 output packs 16 rows/vreg; also valid for f32 input
TILE_M_MAX = 2048   # large row tile: ~85%+ of HBM roofline needs tile >= 512


def _round_up(x, m):
    return (x + m - 1) // m * m


def dnn_kernel(x_ref, w1_ref, b1_ref, w2_ref, b2_ref, w3_ref, b3_ref, o_ref):
    # x tile arrives f32; cast to bf16 in-kernel (VPU cast, hides under DMA/MXU).
    x = x_ref[...].astype(jnp.bfloat16)

    # layer1 + ReLU   (dropout = identity in eval mode)
    h1 = jnp.dot(x, w1_ref[...], preferred_element_type=jnp.float32) + b1_ref[...]
    h1 = jnp.maximum(h1, 0.0).astype(jnp.bfloat16)

    # layer2 + ReLU
    h2 = jnp.dot(h1, w2_ref[...], preferred_element_type=jnp.float32) + b2_ref[...]
    h2 = jnp.maximum(h2, 0.0).astype(jnp.bfloat16)

    # layer3 (logits; lane-padded to 128, real classes live in [:, :num_classes]).
    # bf16 store halves writeback bytes on the dominant HBM stream.
    logits = jnp.dot(h2, w3_ref[...], preferred_element_type=jnp.float32) + b3_ref[...]
    o_ref[...] = logits.astype(o_ref.dtype)


def prepare_params(params, num_classes=2):
    """One-time pad + cast of weights/biases (kept OFF the per-call hot path).

    Zero-padding keeps the math exact: padded hidden units see zero
    weights/bias -> relu(0)=0 -> contribute nothing downstream; padded logit
    lanes stay 0 and are sliced off by dnn_forward.
    """
    w1, b1 = params["w1"], params["b1"]
    w2, b2 = params["w2"], params["b2"]
    w3, b3 = params["w3"], params["b3"]

    in_f, hidden = w1.shape
    h_pad = _round_up(hidden, LANE)
    c_pad = _round_up(num_classes, LANE)
    bf16 = jnp.bfloat16

    w1_p = jnp.zeros((in_f, h_pad), bf16).at[:, :hidden].set(w1.astype(bf16))
    b1_p = jnp.zeros((1, h_pad), jnp.float32).at[:, :hidden].set(b1.reshape(1, -1))
    w2_p = jnp.zeros((h_pad, h_pad), bf16).at[:hidden, :hidden].set(w2.astype(bf16))
    b2_p = jnp.zeros((1, h_pad), jnp.float32).at[:, :hidden].set(b2.reshape(1, -1))
    w3_p = jnp.zeros((h_pad, c_pad), bf16).at[:hidden, :num_classes].set(w3.astype(bf16))
    b3_p = jnp.zeros((1, c_pad), jnp.float32).at[:, :num_classes].set(b3.reshape(1, -1))

    return {
        "w1": w1_p, "b1": b1_p, "w2": w2_p, "b2": b2_p, "w3": w3_p, "b3": b3_p,
        "in_f": in_f, "h_pad": h_pad, "c_pad": c_pad, "num_classes": num_classes,
    }


def dnn_forward(x, pp):
    """x: [B, input_size] float32. pp: output of prepare_params()."""
    batch, in_f = x.shape
    assert in_f == pp["in_f"]
    h_pad, c_pad, num_classes = pp["h_pad"], pp["c_pad"], pp["num_classes"]

    # Row tile: as large as possible, but target >= 2 grid steps when the
    # batch allows it so ("parallel",) splits work across v7x's two TCs.
    half = (batch + 1) // 2
    tile_m = min(TILE_M_MAX, max(SUBLANE, _round_up(half, SUBLANE)))
    b_pad = _round_up(batch, tile_m)
    grid_m = b_pad // tile_m

    # x stays f32; only pad when the batch is not tile-aligned (no extra
    # full pass over x in the common aligned case).
    if b_pad == batch:
        x_p = x
    else:
        x_p = jnp.zeros((b_pad, in_f), x.dtype).at[:batch].set(x)

    # VMEM budget from actual buffers (double-buffered tiles + resident
    # weights + in-kernel intermediates), never below the 32 MiB default.
    bytes_x = 2 * tile_m * in_f * 4                       # f32 x tiles
    bytes_o = 2 * tile_m * c_pad * 2                      # bf16 out tiles
    bytes_w = 2 * (
        pp["w1"].size * 2 + pp["w2"].size * 2 + pp["w3"].size * 2
        + (pp["b1"].size + pp["b2"].size + pp["b3"].size) * 4
    )
    bytes_interm = tile_m * h_pad * (2 + 2 + 4 + 4) + tile_m * c_pad * 4
    vmem_limit = max(
        int(bytes_x + bytes_o + bytes_w + bytes_interm) + (4 << 20),
        32 << 20,
    )

    flops = 2 * b_pad * (in_f * h_pad + h_pad * h_pad + h_pad * c_pad)
    bytes_accessed = (
        b_pad * in_f * 4
        + pp["w1"].size * 2 + pp["w2"].size * 2 + pp["w3"].size * 2
        + (pp["b1"].size + pp["b2"].size + pp["b3"].size) * 4
        + b_pad * c_pad * 2
    )
    cost = pl.CostEstimate(
        flops=flops, transcendentals=0, bytes_accessed=bytes_accessed
    )

    out_p = pl.pallas_call(
        dnn_kernel,
        out_shape=jax.ShapeDtypeStruct((b_pad, c_pad), jnp.bfloat16),
        grid=(grid_m,),
        in_specs=[
            pl.BlockSpec((tile_m, in_f), lambda i: (i, 0)),   # x: row-tiled, streamed
            pl.BlockSpec((in_f, h_pad), lambda i: (0, 0)),    # weights stay resident
            pl.BlockSpec((1, h_pad), lambda i: (0, 0)),
            pl.BlockSpec((h_pad, h_pad), lambda i: (0, 0)),
            pl.BlockSpec((1, h_pad), lambda i: (0, 0)),
            pl.BlockSpec((h_pad, c_pad), lambda i: (0, 0)),
            pl.BlockSpec((1, c_pad), lambda i: (0, 0)),
        ],
        out_specs=pl.BlockSpec((tile_m, c_pad), lambda i: (i, 0)),
        compiler_params=pltpu.CompilerParams(
            dimension_semantics=("parallel",),   # megacore sharding on v7x
            vmem_limit_bytes=vmem_limit,
        ),
        cost_estimate=cost,
    )(x_p, pp["w1"], pp["b1"], pp["w2"], pp["b2"], pp["w3"], pp["b3"])

    # Slice off batch/lane padding; upconvert the tiny result to f32 outside.
    return out_p[:batch, :num_classes].astype(jnp.float32)


def init_params(key, input_size, hidden_size=64, num_classes=2):
    """Deterministic init matching nn.Linear default (U(-1/sqrt(fan_in), +))."""
    def linear(key, fan_in, fan_out):
        kw, kb = jax.random.split(key)
        bound = 1.0 / jnp.sqrt(jnp.float32(fan_in))
        # stored as [in, out] so kernel computes x @ W
        w = jax.random.uniform(kw, (fan_in, fan_out), jnp.float32, -bound, bound)
        b = jax.random.uniform(kb, (1, fan_out), jnp.float32, -bound, bound)
        return w, b

    k1, k2, k3 = jax.random.split(key, 3)
    w1, b1 = linear(k1, input_size, hidden_size)
    w2, b2 = linear(k2, hidden_size, hidden_size)
    w3, b3 = linear(k3, hidden_size, num_classes)
    return {"w1": w1, "b1": b1, "w2": w2, "b2": b2, "w3": w3, "b3": b3}


if __name__ == "__main__":
    key = jax.random.PRNGKey(0)
    kx, kp = jax.random.split(key)

    batch = 32            # exercises the multi-step (grid=2) path
    input_size = 32       # stands in for X_train.shape[1]
    hidden_size = 64
    num_classes = 2

    x = jax.random.normal(kx, (batch, input_size), dtype=jnp.float32)
    params = init_params(kp, input_size, hidden_size, num_classes)
    padded = prepare_params(params, num_classes=num_classes)   # one-time pad/cast

    out = dnn_forward(x, padded)
    out = jax.block_until_ready(out)

    # f32 reference (kernel runs bf16 matmuls with f32 accumulation and a
    # bf16 logit store, so tolerance is loosened accordingly)
    h1 = jnp.maximum(x @ params["w1"] + params["b1"], 0.0)
    h2 = jnp.maximum(h1 @ params["w2"] + params["b2"], 0.0)
    ref = h2 @ params["w3"] + params["b3"]

    assert out.shape == (batch, num_classes)
    max_err = float(jnp.max(jnp.abs(out - ref)))
    assert max_err < 5e-2, f"max abs err {max_err}"

    print("KERNEL_OK")
</pallas_src>

<mosaic_0001>
module attributes {stable_mosaic.version = 11 : i64} {
  func.func @dnn_kernel(%arg0: i32, %arg1: memref<16x32xf32, #tpu.memory_space<vmem>>, %arg2: memref<32x128xbf16, #tpu.memory_space<vmem>>, %arg3: memref<1x128xf32, #tpu.memory_space<vmem>>, %arg4: memref<128x128xbf16, #tpu.memory_space<vmem>>, %arg5: memref<1x128xf32, #tpu.memory_space<vmem>>, %arg6: memref<128x128xbf16, #tpu.memory_space<vmem>>, %arg7: memref<1x128xf32, #tpu.memory_space<vmem>>, %arg8: memref<16x128xbf16, #tpu.memory_space<vmem>>) attributes {dimension_semantics = [#tpu.dimension_semantics<parallel>], iteration_bounds = array<i64: 2>, scalar_prefetch = 0 : i64, scratch_operands = 0 : i64, tpu.core_type = #tpu.core_type<tc>, window_params = [{transform_indices = @transform_0, window_bounds = array<i64: 16, 32>}, {pipeline_mode = #tpu.pipeline_mode<synchronous>, transform_indices = @transform_1, window_bounds = array<i64: 32, 128>}, {pipeline_mode = #tpu.pipeline_mode<synchronous>, transform_indices = @transform_2, window_bounds = array<i64: 1, 128>}, {pipeline_mode = #tpu.pipeline_mode<synchronous>, transform_indices = @transform_3, window_bounds = array<i64: 128, 128>}, {pipeline_mode = #tpu.pipeline_mode<synchronous>, transform_indices = @transform_4, window_bounds = array<i64: 1, 128>}, {pipeline_mode = #tpu.pipeline_mode<synchronous>, transform_indices = @transform_5, window_bounds = array<i64: 128, 128>}, {pipeline_mode = #tpu.pipeline_mode<synchronous>, transform_indices = @transform_6, window_bounds = array<i64: 1, 128>}, {transform_indices = @transform_7, window_bounds = array<i64: 16, 128>}]} {
    %c0 = arith.constant 0 : index
    %c0_0 = arith.constant 0 : index
    %0 = vector.load %arg1[%c0, %c0_0] : memref<16x32xf32, #tpu.memory_space<vmem>>, vector<16x32xf32>
    %1 = arith.truncf %0 : vector<16x32xf32> to vector<16x32xbf16>
    %c0_1 = arith.constant 0 : index
    %c0_2 = arith.constant 0 : index
    %2 = vector.load %arg2[%c0_1, %c0_2] : memref<32x128xbf16, #tpu.memory_space<vmem>>, vector<32x128xbf16>
    %cst = arith.constant dense<0.000000e+00> : vector<16x128xf32>
    %3 = tpu.matmul %1, %2, %cst {dimension_numbers = #tpu.dot_dimension_numbers<[1], [0], [0], [1], [0, 0, 1, 1], [], []>} : vector<16x32xbf16>, vector<32x128xbf16>, vector<16x128xf32> -> vector<16x128xf32>
    %c0_3 = arith.constant 0 : index
    %c0_4 = arith.constant 0 : index
    %4 = vector.load %arg3[%c0_3, %c0_4] : memref<1x128xf32, #tpu.memory_space<vmem>>, vector<1x128xf32>
    %5 = vector.broadcast %4 : vector<1x128xf32> to vector<16x128xf32>
    %6 = arith.addf %3, %5 : vector<16x128xf32>
    %cst_5 = arith.constant 0.000000e+00 : f32
    %7 = vector.broadcast %cst_5 : f32 to vector<16x128xf32>
    %8 = arith.maximumf %6, %7 : vector<16x128xf32>
    %9 = arith.truncf %8 : vector<16x128xf32> to vector<16x128xbf16>
    %c0_6 = arith.constant 0 : index
    %c0_7 = arith.constant 0 : index
    %10 = vector.load %arg4[%c0_6, %c0_7] : memref<128x128xbf16, #tpu.memory_space<vmem>>, vector<128x128xbf16>
    %cst_8 = arith.constant dense<0.000000e+00> : vector<16x128xf32>
    %11 = tpu.matmul %9, %10, %cst_8 {dimension_numbers = #tpu.dot_dimension_numbers<[1], [0], [0], [1], [0, 0, 1, 1], [], []>} : vector<16x128xbf16>, vector<128x128xbf16>, vector<16x128xf32> -> vector<16x128xf32>
    %c0_9 = arith.constant 0 : index
    %c0_10 = arith.constant 0 : index
    %12 = vector.load %arg5[%c0_9, %c0_10] : memref<1x128xf32, #tpu.memory_space<vmem>>, vector<1x128xf32>
    %13 = vector.broadcast %12 : vector<1x128xf32> to vector<16x128xf32>
    %14 = arith.addf %11, %13 : vector<16x128xf32>
    %cst_11 = arith.constant 0.000000e+00 : f32
    %15 = vector.broadcast %cst_11 : f32 to vector<16x128xf32>
    %16 = arith.maximumf %14, %15 : vector<16x128xf32>
    %17 = arith.truncf %16 : vector<16x128xf32> to vector<16x128xbf16>
    %c0_12 = arith.constant 0 : index
    %c0_13 = arith.constant 0 : index
    %18 = vector.load %arg6[%c0_12, %c0_13] : memref<128x128xbf16, #tpu.memory_space<vmem>>, vector<128x128xbf16>
    %cst_14 = arith.constant dense<0.000000e+00> : vector<16x128xf32>
    %19 = tpu.matmul %17, %18, %cst_14 {dimension_numbers = #tpu.dot_dimension_numbers<[1], [0], [0], [1], [0, 0, 1, 1], [], []>} : vector<16x128xbf16>, vector<128x128xbf16>, vector<16x128xf32> -> vector<16x128xf32>
    %c0_15 = arith.constant 0 : index
    %c0_16 = arith.constant 0 : index
    %20 = vector.load %arg7[%c0_15, %c0_16] : memref<1x128xf32, #tpu.memory_space<vmem>>, vector<1x128xf32>
    %21 = vector.broadcast %20 : vector<1x128xf32> to vector<16x128xf32>
    %22 = arith.addf %19, %21 : vector<16x128xf32>
    %23 = arith.truncf %22 : vector<16x128xf32> to vector<16x128xbf16>
    %c0_17 = arith.constant 0 : index
    %c0_18 = arith.constant 0 : index
    %24 = vector.load %arg8[%c0_17, %c0_18] : memref<16x128xbf16, #tpu.memory_space<vmem>>, vector<16x128xbf16>
    tpu.vector_store %arg8[%c0_17, %c0_18], %23 {strides = array<i32>} : memref<16x128xbf16, #tpu.memory_space<vmem>>, vector<16x128xbf16>,
    return
  }
  func.func @transform_0(%arg0: i32) -> (i32, i32) {
    %c0_i32 = arith.constant 0 : i32
    %c0_i32_0 = arith.constant 0 : i32
    return %arg0, %c0_i32 : i32, i32
  }
  func.func @transform_1(%arg0: i32) -> (i32, i32) {
    %c0_i32 = arith.constant 0 : i32
    %c0_i32_0 = arith.constant 0 : i32
    %c0_i32_1 = arith.constant 0 : i32
    return %c0_i32, %c0_i32_0 : i32, i32
  }
  func.func @transform_2(%arg0: i32) -> (i32, i32) {
    %c0_i32 = arith.constant 0 : i32
    %c0_i32_0 = arith.constant 0 : i32
    %c0_i32_1 = arith.constant 0 : i32
    return %c0_i32, %c0_i32_0 : i32, i32
  }
  func.func @transform_3(%arg0: i32) -> (i32, i32) {
    %c0_i32 = arith.constant 0 : i32
    %c0_i32_0 = arith.constant 0 : i32
    %c0_i32_1 = arith.constant 0 : i32
    return %c0_i32, %c0_i32_0 : i32, i32
  }
  func.func @transform_4(%arg0: i32) -> (i32, i32) {
    %c0_i32 = arith.constant 0 : i32
    %c0_i32_0 = arith.constant 0 : i32
    %c0_i32_1 = arith.constant 0 : i32
    return %c0_i32, %c0_i32_0 : i32, i32
  }
  func.func @transform_5(%arg0: i32) -> (i32, i32) {
    %c0_i32 = arith.constant 0 : i32
    %c0_i32_0 = arith.constant 0 : i32
    %c0_i32_1 = arith.constant 0 : i32
    return %c0_i32, %c0_i32_0 : i32, i32
  }
  func.func @transform_6(%arg0: i32) -> (i32, i32) {
    %c0_i32 = arith.constant 0 : i32
    %c0_i32_0 = arith.constant 0 : i32
    %c0_i32_1 = arith.constant 0 : i32
    return %c0_i32, %c0_i32_0 : i32, i32
  }
  func.func @transform_7(%arg0: i32) -> (i32, i32) {
    %c0_i32 = arith.constant 0 : i32
    %c0_i32_0 = arith.constant 0 : i32
    return %arg0, %c0_i32 : i32, i32
  }
}

</mosaic_0001>

<llo_original>
// kernel: tpu_custom_call.1
$region0: #{tpu_custom_call.1}
  #allocation0 [shape = 'u32[]', space=smem, size = 0x4, offset = 0x4, fixed_abs, tag = 'smem constant byte address 0x4 - core index']
  #allocation1 [shape = 'u32[144,128]{1,0:T(1,128)}', space=vmem, size = 0x12000, scoped, tag = 'internal scratch']
  %s0 = inlined_call_operand.hbm [shape: f32[32,32], index: 0, kind: input, shape index: {}]
  %s1 = inlined_call_operand.hbm [shape: bf16[32,128], index: 1, kind: input, shape index: {}]
  %s2 = inlined_call_operand.vmem [shape: f32[1,128], index: 2, kind: input, shape index: {}]
  %s3 = inlined_call_operand.hbm [shape: bf16[128,128], index: 3, kind: input, shape index: {}]
  %s4 = inlined_call_operand.vmem [shape: f32[1,128], index: 4, kind: input, shape index: {}]
  %s5 = inlined_call_operand.hbm [shape: bf16[128,128], index: 5, kind: input, shape index: {}]
  %s6 = inlined_call_operand.vmem [shape: f32[1,128], index: 6, kind: input, shape index: {}]
  %s7 = inlined_call_operand.hbm [shape: bf16[32,128], index: 7, kind: output, shape index: {}]
  %s8 = sld [smem:[#allocation0]]
  $region77: #{tpu_custom_call.1} parent=0
    _
  %s10 = ssub.s32 1, %s8
  %s11 = scalar_select 0, %s10, %s8
  $region1: #{tpu_custom_call.1} parent=0
    #allocation2 [shape = 'u8[16384]{0}', space=vmem, size = 0x4000, scoped, tag = 'input window, operand 0']
    #allocation3 [shape = 's32[2]{0}', space=sflag, size = 0x8, scoped, tag = 'scoped memory for tpu_custom_call.1']
    #allocation4 [shape = 's32[2]{0}', space=sflag, size = 0x8, scoped, tag = 'scoped memory for tpu_custom_call.1']
    #allocation5 [shape = 'u8[8192]{0}', space=vmem, size = 0x2000, scoped, tag = 'input window, operand 1, single buffered']
    #allocation6 [shape = 's32[1]{0}', space=sflag, size = 0x4, scoped, tag = 'scoped memory for tpu_custom_call.1']
    #allocation7 [shape = 'u8[32768]{0}', space=vmem, size = 0x8000, scoped, tag = 'input window, operand 3, single buffered']
    #allocation8 [shape = 'u8[32768]{0}', space=vmem, size = 0x8000, scoped, tag = 'input window, operand 5, single buffered']
    #allocation9 [shape = 's32[1]{0}', space=sflag, size = 0x4, scoped, tag = 'scoped memory for tpu_custom_call.1']
    #allocation10 [shape = 'u8[8192]{0}', space=vmem, size = 0x2000, scoped, tag = 'output window, operand 0']
    %12 = vsyncpa [#allocation3], 0
    %s13 = scalar_lea.sflag [#allocation3], 1
    %14 = vsyncpa %s13, 0
    %15 = vsyncpa [#allocation6], 0
    %16 = vsyncpa [#allocation9], 0
    %17 = vsyncpa [#allocation4], 0
    %s18 = scalar_lea.sflag [#allocation4], 1
    %19 = vsyncpa %s18, 0
    loop: start=0, step=1, limit=4
    $region2: #{tpu_custom_call.1} parent=1 // loop_pre_header
      _
    $region3: #{tpu_custom_call.1} parent=1 // loop_header
      %s21 = sphi 0, %s25
      %p22 = scmp.ge.s32.totalorder %s21, 4
      %s31 = sphi 0, %s33
      %s34 = sphi 0, %s31
      %s35 = sphi 0, %s34
      %s51 = sphi 0, %s35
      %s55 = sphi 0, %s55
      %s57 = sphi 0, %s55
      %s58 = sphi 0, %s57
      %s72 = sphi 0, %s58
      %s76 = sphi 0, %s76
      %s78 = sphi 0, %s76
      %s79 = sphi 0, %s78
      %s93 = sphi 0, %s79
      %s97 = sphi 0, %s97
      %s99 = sphi 0, %s97
      %s100 = sphi 0, %s99
      %s114 = sphi 0, %s100
      %s118 = sphi 0, %s118
      %s120 = sphi 0, %s118
      %s121 = sphi 0, %s120
      %s135 = sphi 0, %s121
      %s139 = sphi 0, %s139
      %s141 = sphi 0, %s139
      %s142 = sphi 0, %s141
      %s156 = sphi 0, %s142
      %s160 = sphi 0, %s160
      %s162 = sphi 0, %s160
      %s163 = sphi 0, %s162
      %s177 = sphi 0, %s163
      %s183 = sphi 0, %s185
      %s186 = sphi 0, %s183
      %s187 = sphi 0, %s186
      %s203 = sphi 0, %s187
    $region4: #{tpu_custom_call.1} parent=1 // loop_header_branch
      %24 = sbr.rel (%p22) target = $region8
    $region5: #{tpu_custom_call.1} parent=1 // loop_body
      %s26 = ssub.s32 %s21, 1
      %s27 = ssub.s32 %s21, 2
      %s28 = sadd.s32 %s21, 1
      %s29 = ssub.s32 %s21, %s28
      %p30 = scmp.eq.s32.totalorder %s29, 0
      %s32 = sadd.s32 %s31, 1
      %s33 = scalar_select %p30, %s31, %s32
      %p36 = pneg %p30
      %p37 = scmp.eq.s32.totalorder %s21, 1
      %p38 = por %p36, %p37
      %p39 = scmp.ne.s32.totalorder %s31, %s34
      %p40 = scmp.eq.s32.totalorder %s21, 0
      %p41 = por %p39, %p40
      %p42 = scmp.ne.s32.totalorder %s31, %s34
      %p43 = scmp.eq.s32.totalorder %s26, 1
      %p44 = por %p42, %p43
      %p45 = scmp.ne.s32.totalorder %s34, %s35
      %p46 = scmp.eq.s32.totalorder %s26, 0
      %p47 = por %p45, %p46
      %p48 = scmp.ne.s32.totalorder %s34, %s35
      %p49 = scmp.eq.s32.totalorder %s27, 1
      %p50 = por %p48, %p49
      %p52 = scmp.ne.s32.totalorder %s35, %s51
      %p53 = scmp.eq.s32.totalorder %s27, 0
      %p54 = por %p52, %p53
      %s56 = sadd.s32 %s55, 1
      %p59 = scmp.eq.s32.totalorder %s21, 1
      %p60 = scmp.ne.s32.totalorder %s55, %s57
      %p61 = scmp.eq.s32.totalorder %s21, 0
      %p62 = por %p60, %p61
      %p63 = scmp.ne.s32.totalorder %s55, %s57
      %p64 = scmp.eq.s32.totalorder %s26, 1
      %p65 = por %p63, %p64
      %p66 = scmp.ne.s32.totalorder %s57, %s58
      %p67 = scmp.eq.s32.totalorder %s26, 0
      %p68 = por %p66, %p67
      %p69 = scmp.ne.s32.totalorder %s57, %s58
      %p70 = scmp.eq.s32.totalorder %s27, 1
      %p71 = por %p69, %p70
      %p73 = scmp.ne.s32.totalorder %s58, %s72
      %p74 = scmp.eq.s32.totalorder %s27, 0
      %p75 = por %p73, %p74
      %s77 = sadd.s32 %s76, 1
      %p80 = scmp.eq.s32.totalorder %s21, 1
      %p81 = scmp.ne.s32.totalorder %s76, %s78
      %p82 = scmp.eq.s32.totalorder %s21, 0
      %p83 = por %p81, %p82
      %p84 = scmp.ne.s32.totalorder %s76, %s78
      %p85 = scmp.eq.s32.totalorder %s26, 1
      %p86 = por %p84, %p85
      %p87 = scmp.ne.s32.totalorder %s78, %s79
      %p88 = scmp.eq.s32.totalorder %s26, 0
      %p89 = por %p87, %p88
      %p90 = scmp.ne.s32.totalorder %s78, %s79
      %p91 = scmp.eq.s32.totalorder %s27, 1
      %p92 = por %p90, %p91
      %p94 = scmp.ne.s32.totalorder %s79, %s93
      %p95 = scmp.eq.s32.totalorder %s27, 0
      %p96 = por %p94, %p95
      %s98 = sadd.s32 %s97, 1
      %p101 = scmp.eq.s32.totalorder %s21, 1
      %p102 = scmp.ne.s32.totalorder %s97, %s99
      %p103 = scmp.eq.s32.totalorder %s21, 0
      %p104 = por %p102, %p103
      %p105 = scmp.ne.s32.totalorder %s97, %s99
      %p106 = scmp.eq.s32.totalorder %s26, 1
      %p107 = por %p105, %p106
      %p108 = scmp.ne.s32.totalorder %s99, %s100
      %p109 = scmp.eq.s32.totalorder %s26, 0
      %p110 = por %p108, %p109
      %p111 = scmp.ne.s32.totalorder %s99, %s100
      %p112 = scmp.eq.s32.totalorder %s27, 1
      %p113 = por %p111, %p112
      %p115 = scmp.ne.s32.totalorder %s100, %s114
      %p116 = scmp.eq.s32.totalorder %s27, 0
      %p117 = por %p115, %p116
      %s119 = sadd.s32 %s118, 1
      %p122 = scmp.eq.s32.totalorder %s21, 1
      %p123 = scmp.ne.s32.totalorder %s118, %s120
      %p124 = scmp.eq.s32.totalorder %s21, 0
      %p125 = por %p123, %p124
      %p126 = scmp.ne.s32.totalorder %s118, %s120
      %p127 = scmp.eq.s32.totalorder %s26, 1
      %p128 = por %p126, %p127
      %p129 = scmp.ne.s32.totalorder %s120, %s121
      %p130 = scmp.eq.s32.totalorder %s26, 0
      %p131 = por %p129, %p130
      %p132 = scmp.ne.s32.totalorder %s120, %s121
      %p133 = scmp.eq.s32.totalorder %s27, 1
      %p134 = por %p132, %p133
      %p136 = scmp.ne.s32.totalorder %s121, %s135
      %p137 = scmp.eq.s32.totalorder %s27, 0
      %p138 = por %p136, %p137
      %s140 = sadd.s32 %s139, 1
      %p143 = scmp.eq.s32.totalorder %s21, 1
      %p144 = scmp.ne.s32.totalorder %s139, %s141
      %p145 = scmp.eq.s32.totalorder %s21, 0
      %p146 = por %p144, %p145
      %p147 = scmp.ne.s32.totalorder %s139, %s141
      %p148 = scmp.eq.s32.totalorder %s26, 1
      %p149 = por %p147, %p148
      %p150 = scmp.ne.s32.totalorder %s141, %s142
      %p151 = scmp.eq.s32.totalorder %s26, 0
      %p152 = por %p150, %p151
      %p153 = scmp.ne.s32.totalorder %s141, %s142
      %p154 = scmp.eq.s32.totalorder %s27, 1
      %p155 = por %p153, %p154
      %p157 = scmp.ne.s32.totalorder %s142, %s156
      %p158 = scmp.eq.s32.totalorder %s27, 0
      %p159 = por %p157, %p158
      %s161 = sadd.s32 %s160, 1
      %p164 = scmp.eq.s32.totalorder %s21, 1
      %p165 = scmp.ne.s32.totalorder %s160, %s162
      %p166 = scmp.eq.s32.totalorder %s21, 0
      %p167 = por %p165, %p166
      %p168 = scmp.ne.s32.totalorder %s160, %s162
      %p169 = scmp.eq.s32.totalorder %s26, 1
      %p170 = por %p168, %p169
      %p171 = scmp.ne.s32.totalorder %s162, %s163
      %p172 = scmp.eq.s32.totalorder %s26, 0
      %p173 = por %p171, %p172
      %p174 = scmp.ne.s32.totalorder %s162, %s163
      %p175 = scmp.eq.s32.totalorder %s27, 1
      %p176 = por %p174, %p175
      %p178 = scmp.ne.s32.totalorder %s163, %s177
      %p179 = scmp.eq.s32.totalorder %s27, 0
      %p180 = por %p178, %p179
      %s181 = ssub.s32 %s21, %s28
      %p182 = scmp.eq.s32.totalorder %s181, 0
      %s184 = sadd.s32 %s183, 1
      %s185 = scalar_select %p182, %s183, %s184
      %p188 = pneg %p182
      %p189 = scmp.eq.s32.totalorder %s21, 1
      %p190 = por %p188, %p189
      %p191 = scmp.ne.s32.totalorder %s183, %s186
      %p192 = scmp.eq.s32.totalorder %s21, 0
      %p193 = por %p191, %p192
      %p194 = scmp.ne.s32.totalorder %s183, %s186
      %p195 = scmp.eq.s32.totalorder %s26, 1
      %p196 = por %p194, %p195
      %p197 = scmp.ne.s32.totalorder %s186, %s187
      %p198 = scmp.eq.s32.totalorder %s26, 0
      %p199 = por %p197, %p198
      %p200 = scmp.ne.s32.totalorder %s186, %s187
      %p201 = scmp.eq.s32.totalorder %s27, 1
      %p202 = por %p200, %p201
      %p204 = scmp.ne.s32.totalorder %s187, %s203
      %p205 = scmp.eq.s32.totalorder %s27, 0
      %p206 = por %p204, %p205
      %p207 = scmp.le.s32.totalorder 1, %s21
      %p208 = scmp.lt.s32.totalorder %s21, 3
      %p209 = pnand %p207, %p208
      %p210 = pneg %p209
      // Predicated region
      $region9: #{tpu_custom_call.1} parent=5 // pred_check
        _
      $region10: #{tpu_custom_call.1} parent=5 // pred_check_branch
        %212 = sbr.rel (%p209) target = $region12
      $region11: #{tpu_custom_call.1} parent=5 // pred_region
        %s213 = ssub.s32 %s21, 1
        // Predicated region
        $region13: #{tpu_custom_call.1} parent=11 // pred_check
          %p214 = pneg %p68
        $region14: #{tpu_custom_call.1} parent=11 // pred_check_branch
          %216 = sbr.rel (%p214) target = $region16
        $region15: #{tpu_custom_call.1} parent=11 // pred_region
          %s218 = ssub.s32 256, 256
          %219 = vsyncadd [#allocation6], %s218
          %s220 = sshll.u32 [#allocation5], 4
          %s221 = int_to_ptr.vmem [resolvable:$true] %s220
          %226 = dma.hbm_to_vmem [thread:$0]  %s1, 256, %s221, [#allocation6], 64, 64, 4
        $region16: #{tpu_custom_call.1} parent=11 // pred_fallthru
          _
        // Predicated region
        $region17: #{tpu_custom_call.1} parent=11 // pred_check
          %p227 = pneg %p89
        $region18: #{tpu_custom_call.1} parent=11 // pred_check_branch
          %229 = sbr.rel (%p227) target = $region20
        $region19: #{tpu_custom_call.1} parent=11 // pred_region
          _
        $region20: #{tpu_custom_call.1} parent=11 // pred_fallthru
          _
        // Predicated region
        $region21: #{tpu_custom_call.1} parent=11 // pred_check
          %p230 = pneg %p110
        $region22: #{tpu_custom_call.1} parent=11 // pred_check_branch
          %232 = sbr.rel (%p230) target = $region24
        $region23: #{tpu_custom_call.1} parent=11 // pred_region
          %s234 = ssub.s32 1024, 1024
          %235 = vsyncadd [#allocation6], %s234
          %s236 = sshll.u32 [#allocation7], 4
          %s237 = int_to_ptr.vmem [resolvable:$true] %s236
          %242 = dma.hbm_to_vmem [thread:$0]  %s3, 1024, %s237, [#allocation6], 64, 64, 4
        $region24: #{tpu_custom_call.1} parent=11 // pred_fallthru
          _
        // Predicated region
        $region25: #{tpu_custom_call.1} parent=11 // pred_check
          %p243 = pneg %p131
        $region26: #{tpu_custom_call.1} parent=11 // pred_check_branch
          %245 = sbr.rel (%p243) target = $region28
        $region27: #{tpu_custom_call.1} parent=11 // pred_region
          _
        $region28: #{tpu_custom_call.1} parent=11 // pred_fallthru
          _
        // Predicated region
        $region29: #{tpu_custom_call.1} parent=11 // pred_check
          %p246 = pneg %p152
        $region30: #{tpu_custom_call.1} parent=11 // pred_check_branch
          %248 = sbr.rel (%p246) target = $region32
        $region31: #{tpu_custom_call.1} parent=11 // pred_region
          %s250 = ssub.s32 1024, 1024
          %251 = vsyncadd [#allocation9], %s250
          %s252 = sshll.u32 [#allocation8], 4
          %s253 = int_to_ptr.vmem [resolvable:$true] %s252
          %258 = dma.hbm_to_vmem [thread:$0]  %s5, 1024, %s253, [#allocation9], 64, 64, 4
        $region32: #{tpu_custom_call.1} parent=11 // pred_fallthru
          _
        // Predicated region
        $region33: #{tpu_custom_call.1} parent=11 // pred_check
          %p259 = pneg %p173
        $region34: #{tpu_custom_call.1} parent=11 // pred_check_branch
          %261 = sbr.rel (%p259) target = $region36
        $region35: #{tpu_custom_call.1} parent=11 // pred_region
          _
        $region36: #{tpu_custom_call.1} parent=11 // pred_fallthru
          _
      $region12: #{tpu_custom_call.1} parent=5 // pred_fallthru
        _
      %p262 = scmp.lt.s32.totalorder %s21, 2
      // Predicated region
      $region37: #{tpu_custom_call.1} parent=5 // pred_check
        %p263 = pneg %p262
      $region38: #{tpu_custom_call.1} parent=5 // pred_check_branch
        %265 = sbr.rel (%p263) target = $region40
      $region39: #{tpu_custom_call.1} parent=5 // pred_region
        // Predicated region
        $region41: #{tpu_custom_call.1} parent=39 // pred_check
          %p266 = pneg %p41
        $region42: #{tpu_custom_call.1} parent=39 // pred_check_branch
          %268 = sbr.rel (%p266) target = $region44
        $region43: #{tpu_custom_call.1} parent=39 // pred_region
          %s269 = sand.u32 %s31, 1
          %s270 = scalar_lea.sflag [#allocation3], %s269
          %s271 = sand.u32 %s31, 1
          %s272 = smul.addr %s271, 16
          %s273 = scalar_lea.vmem [#allocation2], %s272
          %s274 = smul.u32 2, %s21
          %s276 = ssub.s32 256, 256
          %277 = vsyncadd %s270, %s276
          %s278 = smul.addr %s274, 128
          %s279 = scalar_lea.hbm %s0, %s278
          %s280 = sshll.u32 %s273, 4
          %s281 = int_to_ptr.vmem [resolvable:$true] %s280
          %286 = dma.hbm_to_vmem [thread:$0]  %s279, 256, %s281, %s270, 128, 128, 8
        $region44: #{tpu_custom_call.1} parent=39 // pred_fallthru
          _
      $region40: #{tpu_custom_call.1} parent=5 // pred_fallthru
        _
      %p287 = scmp.le.s32.totalorder 1, %s21
      %p288 = scmp.lt.s32.totalorder %s21, 3
      %p289 = pnand %p287, %p288
      %p290 = pneg %p289
      // Predicated region
      $region45: #{tpu_custom_call.1} parent=5 // pred_check
        _
      $region46: #{tpu_custom_call.1} parent=5 // pred_check_branch
        %292 = sbr.rel (%p289) target = $region48
      $region47: #{tpu_custom_call.1} parent=5 // pred_region
        %s293 = ssub.s32 %s21, 1
        %s294 = sand.u32 %s34, 1
        %s295 = scalar_lea.sflag [#allocation3], %s294
        %s296 = sand.u32 %s34, 1
        %s297 = smul.addr %s296, 16
        %s298 = scalar_lea.vmem [#allocation2], %s297
        // Predicated region
        $region49: #{tpu_custom_call.1} parent=47 // pred_check
          %p299 = pneg %p47
        $region50: #{tpu_custom_call.1} parent=47 // pred_check_branch
          %301 = sbr.rel (%p299) target = $region52
        $region51: #{tpu_custom_call.1} parent=47 // pred_region
          %302 = dma.done %s295, 256
        $region52: #{tpu_custom_call.1} parent=47 // pred_fallthru
          _
        // Predicated region
        $region53: #{tpu_custom_call.1} parent=47 // pred_check
          %p303 = pneg %p68
        $region54: #{tpu_custom_call.1} parent=47 // pred_check_branch
          %305 = sbr.rel (%p303) target = $region56
        $region55: #{tpu_custom_call.1} parent=47 // pred_region
          %306 = dma.done [#allocation6], 256
        $region56: #{tpu_custom_call.1} parent=47 // pred_fallthru
          _
        // Predicated region
        $region57: #{tpu_custom_call.1} parent=47 // pred_check
          %p307 = pneg %p110
        $region58: #{tpu_custom_call.1} parent=47 // pred_check_branch
          %309 = sbr.rel (%p307) target = $region60
        $region59: #{tpu_custom_call.1} parent=47 // pred_region
          %310 = dma.done [#allocation6], 1024
        $region60: #{tpu_custom_call.1} parent=47 // pred_fallthru
          _
        // Predicated region
        $region61: #{tpu_custom_call.1} parent=47 // pred_check
          %p311 = pneg %p152
        $region62: #{tpu_custom_call.1} parent=47 // pred_check_branch
          %313 = sbr.rel (%p311) target = $region64
        $region63: #{tpu_custom_call.1} parent=47 // pred_region
          %314 = dma.done [#allocation9], 1024
        $region64: #{tpu_custom_call.1} parent=47 // pred_fallthru
          _
        %s315 = sand.u32 %s34, 1
        %s316 = scalar_lea.sflag [#allocation3], %s315
        %s317 = sand.u32 %s34, 1
        %s318 = smul.addr %s317, 16
        %s319 = scalar_lea.vmem [#allocation2], %s318
        %p320 = pneg %p47
        %p321 = pneg %p44
        %p322 = pneg %p68
        %p323 = pneg %p65
        %p324 = pneg %p89
        %p325 = pneg %p86
        %p326 = pneg %p110
        %p327 = pneg %p107
        %p328 = pneg %p131
        %p329 = pneg %p128
        %p330 = pneg %p152
        %p331 = pneg %p149
        %p332 = pneg %p173
        %p333 = pneg %p170
        %p334 = pneg %p199
        %p335 = pneg %p196
        %s336 = sand.u32 %s186, 1
        %s337 = scalar_lea.sflag [#allocation4], %s336
        %s338 = sand.u32 %s186, 1
        %s339 = smul.addr %s338, 8
        %s340 = scalar_lea.vmem [#allocation10], %s339
        %s341 = smul.u32 2, %s26
        %s342 = smul.u32 2, %s26
        %v344 = vld [vmem:[%s298] sm:$0xff]
        %v345 = vld [vmem:[%s298 + $0x8] sm:$0xff]
        %v346 = vpack.c.bf16 %v345, %v344
        %v347 = vld [vmem:[#allocation5] sm:$0xf]
        %v348 = vld [vmem:[#allocation5 + $0x4] sm:$0xf]
        %v349 = vld [vmem:[#allocation5 + $0x8] sm:$0xf]
        %v350 = vld [vmem:[#allocation5 + $0xc] sm:$0xf]
        %v351 = vld [vmem:[%s2] sm:$0x1]
        %v353 = vlaneseq
        %v354 = vshrl.u32 %v353, 7
        %v355 = vsub.s32 0, %v354
        %v356 = vrot.slane %v351, %v355
        %v362 = vunpack.c.l.b16 %v347
        %v363 = vunpack.c.l.b16 %v348
        %v364 = vunpack.c.l.b16 %v349
        %v365 = vunpack.c.l.b16 %v350
        %v366 = vpack.c.b16 %v363, %v362
        %v367 = vpack.c.b16 %v365, %v364
        %vm370 = vcmask 261120
        %v372 = vsel %vm370, %v346, 0
        %374 = vmatprep.subr.bf16.mxu0 0
        %375 = vmatpush1.bf16.msra.mxu0 %v366
        %376 = vmatprep.subr.bf16.mxu0 0
        %377 = vmatpush1.bf16.msra.mxu0 %v367
        %378 = vmatprep.subr.bf16.mxu0 0
        %379 = vmatpush1.bf16.msra.mxu0 0
        %380 = vmatprep.subr.bf16.mxu0 0
        %381 = vmatpush1.bf16.msra.mxu0 0
        %382 = vmatprep.subr.bf16.mxu0 0
        %383 = vmatpush1.bf16.msra.mxu0 0
        %384 = vmatprep.subr.bf16.mxu0 0
        %385 = vmatpush1.bf16.msra.mxu0 0
        %386 = vmatprep.subr.bf16.mxu0 0
        %387 = vmatpush1.bf16.msra.mxu0 0
        %388 = vmatprep.subr.bf16.mxu0 0
        %389 = vmatpush1.bf16.msra.mxu0 0
        %390 = vmatprep.subr.bf16.mxu0 0
        %391 = vmatpush1.bf16.msra.mxu0 0
        %392 = vmatprep.subr.bf16.mxu0 0
        %393 = vmatpush1.bf16.msra.mxu0 0
        %394 = vmatprep.subr.bf16.mxu0 0
        %395 = vmatpush1.bf16.msra.mxu0 0
        %396 = vmatprep.subr.bf16.mxu0 0
        %397 = vmatpush1.bf16.msra.mxu0 0
        %398 = vmatprep.subr.bf16.mxu0 0
        %399 = vmatpush1.bf16.msra.mxu0 0
        %400 = vmatprep.subr.bf16.mxu0 0
        %401 = vmatpush1.bf16.msra.mxu0 0
        %402 = vmatprep.subr.bf16.mxu0 0
        %403 = vmatpush1.bf16.msra.mxu0 0
        %404 = vmatprep.subr.bf16.mxu0 0
        %405 = vmatpush1.bf16.msra.mxu0 0
        %406 = vmatprep.mubr.bf16.mxu0 0
        %407 = vmatmul.mubr.bf16.gmra.mrb[0].mxu0 %v372
        %v408 = vpop.f32.mrb[0].mxu0
        %v409 = vadd.f32 %v356, %v408
        %v410 = vpop.f32.mrb[0].mxu0
        %v411 = vpop.f32.mrb[0].mxu0
        %v412 = vadd.f32 %v356, %v411
        %v413 = vpop.f32.mrb[0].mxu0
        %414 = vdwg.mxu0
        %v415 = vmax.f32 %v409, 0.0
        %v416 = vmax.f32 %v412, 0.0
        %v417 = vpack.c.bf16 %v416, %v415
        %v418 = vld [vmem:[#allocation7] sm:$0xf]
        %v419 = vld [vmem:[#allocation7 + $0x4] sm:$0xf]
        %v420 = vld [vmem:[#allocation7 + $0x8] sm:$0xf]
        %v421 = vld [vmem:[#allocation7 + $0xc] sm:$0xf]
        %v422 = vld [vmem:[#allocation7 + $0x10] sm:$0xf]
        %v423 = vld [vmem:[#allocation7 + $0x14] sm:$0xf]
        %v424 = vld [vmem:[#allocation7 + $0x18] sm:$0xf]
        %v425 = vld [vmem:[#allocation7 + $0x1c] sm:$0xf]
        %v426 = vld [vmem:[#allocation7 + $0x20] sm:$0xf]
        %v427 = vld [vmem:[#allocation7 + $0x24] sm:$0xf]
        %v428 = vld [vmem:[#allocation7 + $0x28] sm:$0xf]
        %v429 = vld [vmem:[#allocation7 + $0x2c] sm:$0xf]
        %v430 = vld [vmem:[#allocation7 + $0x30] sm:$0xf]
        %v431 = vld [vmem:[#allocation7 + $0x34] sm:$0xf]
        %v432 = vld [vmem:[#allocation7 + $0x38] sm:$0xf]
        %v433 = vld [vmem:[#allocation7 + $0x3c] sm:$0xf]
        %v434 = vld [vmem:[%s4] sm:$0x1]
        %v436 = vlaneseq
        %v437 = vshrl.u32 %v436, 7
        %v438 = vsub.s32 0, %v437
        %v439 = vrot.slane %v434, %v438
        %v457 = vunpack.c.l.b16 %v418
        %v458 = vunpack.c.l.b16 %v419
        %v459 = vunpack.c.l.b16 %v420
        %v460 = vunpack.c.l.b16 %v421
        %v461 = vunpack.c.l.b16 %v422
        %v462 = vunpack.c.l.b16 %v423
        %v463 = vunpack.c.l.b16 %v424
        %v464 = vunpack.c.l.b16 %v425
        %v465 = vunpack.c.l.b16 %v426
        %v466 = vunpack.c.l.b16 %v427
        %v467 = vunpack.c.l.b16 %v428
        %v468 = vunpack.c.l.b16 %v429
        %v469 = vunpack.c.l.b16 %v430
        %v470 = vunpack.c.l.b16 %v431
        %v471 = vunpack.c.l.b16 %v432
        %v472 = vunpack.c.l.b16 %v433
        %v473 = vpack.c.b16 %v458, %v457
        %v474 = vpack.c.b16 %v460, %v459
        %v475 = vpack.c.b16 %v462, %v461
        %v476 = vpack.c.b16 %v464, %v463
        %v477 = vpack.c.b16 %v466, %v465
        %v478 = vpack.c.b16 %v468, %v467
        %v479 = vpack.c.b16 %v470, %v469
        %v480 = vpack.c.b16 %v472, %v471
        %489 = vmatprep.subr.bf16.mxu0 0
        %490 = vmatpush1.bf16.msra.mxu0 %v473
        %491 = vmatprep.subr.bf16.mxu0 0
        %492 = vmatpush1.bf16.msra.mxu0 %v474
        %493 = vmatprep.subr.bf16.mxu0 0
        %494 = vmatpush1.bf16.msra.mxu0 %v475
        %495 = vmatprep.subr.bf16.mxu0 0
        %496 = vmatpush1.bf16.msra.mxu0 %v476
        %497 = vmatprep.subr.bf16.mxu0 0
        %498 = vmatpush1.bf16.msra.mxu0 %v477
        %499 = vmatprep.subr.bf16.mxu0 0
        %500 = vmatpush1.bf16.msra.mxu0 %v478
        %501 = vmatprep.subr.bf16.mxu0 0
        %502 = vmatpush1.bf16.msra.mxu0 %v479
        %503 = vmatprep.subr.bf16.mxu0 0
        %504 = vmatpush1.bf16.msra.mxu0 %v480
        %505 = vmatprep.subr.bf16.mxu0 0
        %506 = vmatpush1.bf16.msra.mxu0 0
        %507 = vmatprep.subr.bf16.mxu0 0
        %508 = vmatpush1.bf16.msra.mxu0 0
        %509 = vmatprep.subr.bf16.mxu0 0
        %510 = vmatpush1.bf16.msra.mxu0 0
        %511 = vmatprep.subr.bf16.mxu0 0
        %512 = vmatpush1.bf16.msra.mxu0 0
        %513 = vmatprep.subr.bf16.mxu0 0
        %514 = vmatpush1.bf16.msra.mxu0 0
        %515 = vmatprep.subr.bf16.mxu0 0
        %516 = vmatpush1.bf16.msra.mxu0 0
        %517 = vmatprep.subr.bf16.mxu0 0
        %518 = vmatpush1.bf16.msra.mxu0 0
        %519 = vmatprep.subr.bf16.mxu0 0
        %520 = vmatpush1.bf16.msra.mxu0 0
        %521 = vmatprep.mubr.bf16.mxu0 0
        %522 = vmatmul.mubr.bf16.gmra.mrb[0].mxu0 %v417
        %v523 = vpop.f32.mrb[0].mxu0
        %v524 = vadd.f32 %v439, %v523
        %v525 = vpop.f32.mrb[0].mxu0
        %v526 = vpop.f32.mrb[0].mxu0
        %v527 = vadd.f32 %v439, %v526
        %v528 = vpop.f32.mrb[0].mxu0
        %529 = vdwg.mxu0
        %v530 = vmax.f32 %v524, 0.0
        %v531 = vmax.f32 %v527, 0.0
        %v532 = vpack.c.bf16 %v531, %v530
        %v533 = vld [vmem:[#allocation8] sm:$0xf]
        %v534 = vld [vmem:[#allocation8 + $0x4] sm:$0xf]
        %v535 = vld [vmem:[#allocation8 + $0x8] sm:$0xf]
        %v536 = vld [vmem:[#allocation8 + $0xc] sm:$0xf]
        %v537 = vld [vmem:[#allocation8 + $0x10] sm:$0xf]
        %v538 = vld [vmem:[#allocation8 + $0x14] sm:$0xf]
        %v539 = vld [vmem:[#allocation8 + $0x18] sm:$0xf]
        %v540 = vld [vmem:[#allocation8 + $0x1c] sm:$0xf]
        %v541 = vld [vmem:[#allocation8 + $0x20] sm:$0xf]
        %v542 = vld [vmem:[#allocation8 + $0x24] sm:$0xf]
        %v543 = vld [vmem:[#allocation8 + $0x28] sm:$0xf]
        %v544 = vld [vmem:[#allocation8 + $0x2c] sm:$0xf]
        %v545 = vld [vmem:[#allocation8 + $0x30] sm:$0xf]
        %v546 = vld [vmem:[#allocation8 + $0x34] sm:$0xf]
        %v547 = vld [vmem:[#allocation8 + $0x38] sm:$0xf]
        %v548 = vld [vmem:[#allocation8 + $0x3c] sm:$0xf]
        %v549 = vld [vmem:[%s6] sm:$0x1]
        %v551 = vlaneseq
        %v552 = vshrl.u32 %v551, 7
        %v553 = vsub.s32 0, %v552
        %v554 = vrot.slane %v549, %v553
        %v572 = vunpack.c.l.b16 %v533
        %v573 = vunpack.c.l.b16 %v534
        %v574 = vunpack.c.l.b16 %v535
        %v575 = vunpack.c.l.b16 %v536
        %v576 = vunpack.c.l.b16 %v537
        %v577 = vunpack.c.l.b16 %v538
        %v578 = vunpack.c.l.b16 %v539
        %v579 = vunpack.c.l.b16 %v540
        %v580 = vunpack.c.l.b16 %v541
        %v581 = vunpack.c.l.b16 %v542
        %v582 = vunpack.c.l.b16 %v543
        %v583 = vunpack.c.l.b16 %v544
        %v584 = vunpack.c.l.b16 %v545
        %v585 = vunpack.c.l.b16 %v546
        %v586 = vunpack.c.l.b16 %v547
        %v587 = vunpack.c.l.b16 %v548
        %v588 = vpack.c.b16 %v573, %v572
        %v589 = vpack.c.b16 %v575, %v574
        %v590 = vpack.c.b16 %v577, %v576
        %v591 = vpack.c.b16 %v579, %v578
        %v592 = vpack.c.b16 %v581, %v580
        %v593 = vpack.c.b16 %v583, %v582
        %v594 = vpack.c.b16 %v585, %v584
        %v595 = vpack.c.b16 %v587, %v586
        %604 = vmatprep.subr.bf16.mxu0 0
        %605 = vmatpush1.bf16.msra.mxu0 %v588
        %606 = vmatprep.subr.bf16.mxu0 0
        %607 = vmatpush1.bf16.msra.mxu0 %v589
        %608 = vmatprep.subr.bf16.mxu0 0
        %609 = vmatpush1.bf16.msra.mxu0 %v590
        %610 = vmatprep.subr.bf16.mxu0 0
        %611 = vmatpush1.bf16.msra.mxu0 %v591
        %612 = vmatprep.subr.bf16.mxu0 0
        %613 = vmatpush1.bf16.msra.mxu0 %v592
        %614 = vmatprep.subr.bf16.mxu0 0
        %615 = vmatpush1.bf16.msra.mxu0 %v593
        %616 = vmatprep.subr.bf16.mxu0 0
        %617 = vmatpush1.bf16.msra.mxu0 %v594
        %618 = vmatprep.subr.bf16.mxu0 0
        %619 = vmatpush1.bf16.msra.mxu0 %v595
        %620 = vmatprep.subr.bf16.mxu0 0
        %621 = vmatpush1.bf16.msra.mxu0 0
        %622 = vmatprep.subr.bf16.mxu0 0
        %623 = vmatpush1.bf16.msra.mxu0 0
        %624 = vmatprep.subr.bf16.mxu0 0
        %625 = vmatpush1.bf16.msra.mxu0 0
        %626 = vmatprep.subr.bf16.mxu0 0
        %627 = vmatpush1.bf16.msra.mxu0 0
        %628 = vmatprep.subr.bf16.mxu0 0
        %629 = vmatpush1.bf16.msra.mxu0 0
        %630 = vmatprep.subr.bf16.mxu0 0
        %631 = vmatpush1.bf16.msra.mxu0 0
        %632 = vmatprep.subr.bf16.mxu0 0
        %633 = vmatpush1.bf16.msra.mxu0 0
        %634 = vmatprep.subr.bf16.mxu0 0
        %635 = vmatpush1.bf16.msra.mxu0 0
        %636 = vmatprep.mubr.bf16.mxu0 0
        %637 = vmatmul.mubr.bf16.gmra.mrb[0].mxu0 %v532
        %v638 = vpop.f32.mrb[0].mxu0
        %v639 = vadd.f32 %v554, %v638
        %v640 = vpop.f32.mrb[0].mxu0
        %v641 = vpop.f32.mrb[0].mxu0
        %v642 = vadd.f32 %v554, %v641
        %v643 = vpop.f32.mrb[0].mxu0
        %644 = vdwg.mxu0
        %v645 = vpack.c.bf16 %v642, %v639
        %v647 = vunpack.c.l.b16 %v645
        %v648 = vunpack.c.h.b16 %v645
        %v649 = vpack.c.b16 %v647, %v647
        %v650 = vpack.c.b16 %v648, %v648
        %653 = vst [vmem:[%s340] sm:$0xf] %v649
        %654 = vst [vmem:[%s340 + $0x4] sm:$0xf] %v650
        %s655 = sand.u32 %s186, 1
        %s656 = scalar_lea.sflag [#allocation4], %s655
        %s657 = sand.u32 %s186, 1
        %s658 = smul.addr %s657, 8
        %s659 = scalar_lea.vmem [#allocation10], %s658
        // Predicated region
        $region65: #{tpu_custom_call.1} parent=47 // pred_check
          %p660 = pneg %p196
        $region66: #{tpu_custom_call.1} parent=47 // pred_check_branch
          %662 = sbr.rel (%p660) target = $region68
        $region67: #{tpu_custom_call.1} parent=47 // pred_region
          %s663 = smul.u32 2, %s26
          %s665 = ssub.s32 128, 128
          %666 = vsyncadd %s656, %s665
          %s667 = smul.addr %s663, 64
          %s668 = scalar_lea.hbm %s7, %s667
          %s669 = sshll.u32 %s659, 4
          %s670 = int_to_ptr.vmem [resolvable:$true] %s669
          %675 = dma.vmem_to_hbm [thread:$0]  %s670, 128, %s668, %s656, 64, 64, 4
        $region68: #{tpu_custom_call.1} parent=47 // pred_fallthru
          _
      $region48: #{tpu_custom_call.1} parent=5 // pred_fallthru
        _
      %p676 = scmp.le.s32.totalorder 2, %s21
      // Predicated region
      $region69: #{tpu_custom_call.1} parent=5 // pred_check
        %p677 = pneg %p676
      $region70: #{tpu_custom_call.1} parent=5 // pred_check_branch
        %679 = sbr.rel (%p677) target = $region72
      $region71: #{tpu_custom_call.1} parent=5 // pred_region
        %s680 = ssub.s32 %s21, 2
        // Predicated region
        $region73: #{tpu_custom_call.1} parent=71 // pred_check
          %p681 = pneg %p202
        $region74: #{tpu_custom_call.1} parent=71 // pred_check_branch
          %683 = sbr.rel (%p681) target = $region76
        $region75: #{tpu_custom_call.1} parent=71 // pred_region
          %s684 = sand.u32 %s187, 1
          %s685 = scalar_lea.sflag [#allocation4], %s684
          %s686 = sand.u32 %s187, 1
          %s687 = smul.addr %s686, 8
          %s688 = scalar_lea.vmem [#allocation10], %s687
          %689 = dma.done %s685, 128
        $region76: #{tpu_custom_call.1} parent=71 // pred_fallthru
          _
      $region72: #{tpu_custom_call.1} parent=5 // pred_fallthru
        _
    $region6: #{tpu_custom_call.1} parent=1 // loop_footer
      %s25 = sadd.s32 1, %s21
    $region7: #{tpu_custom_call.1} parent=1 // loop_footer_branch
      %20 = sbr.rel target = $region3
    $region8: #{tpu_custom_call.1} parent=1 // loop_exit
      _
    %690 = vsyncpa [#allocation3], 1
    %s691 = scalar_lea.sflag [#allocation3], 1
    %692 = vsyncpa %s691, 1
    %693 = vsyncpa [#allocation6], 1
    %694 = vsyncpa [#allocation9], 1
    %695 = vsyncpa [#allocation4], 1
    %s696 = scalar_lea.sflag [#allocation4], 1
    %697 = vsyncpa %s696, 1

</llo_original>
